<compile_context>
chip_gen: v7x
topology: tpu7x:2x2x1
jax: 0.10.0
libtpu: 0.0.40
codegen_flags: <defaults>
</compile_context>

<pallas_src>
import functools

import jax
import jax.numpy as jnp
from jax.experimental import pallas as pl
from jax.experimental.pallas import tpu as pltpu

LANE = 128
SUB = 8
VMEM_LIMIT_BYTES = 48 * 1024 * 1024  # headroom under v7x's 64 MiB physical VMEM


def _ceil_to(v, m):
    return ((v + m - 1) // m) * m


def _pad2d(a, rows, cols):
    return jnp.zeros((rows, cols), a.dtype).at[:a.shape[0], :a.shape[1]].set(a)


def _pick_tile(total, target, mult):
    # largest multiple of `mult` that divides `total` and is <= target
    best = mult
    t = mult
    cap = min(total, target)
    while t <= cap:
        if total % t == 0:
            best = t
        t += mult
    return best


# ----------------------------------------------------------------------------
# Kernel 1: one GIN layer:  BN( relu( MLP( A @ x + x ) ) )    (BN optional)
# Tiled: grid = (row tiles, A-reduction tiles); f32 accumulator in VMEM scratch.
# ----------------------------------------------------------------------------
def gin_layer_kernel(a_ref, xk_ref, xi_ref, w1_ref, b1_ref, w2_ref, b2_ref,
                     gamma_ref, beta_ref, mean_ref, var_ref, o_ref, acc_ref,
                     *, apply_bn):
    k = pl.program_id(1)

    @pl.when(k == 0)
    def _():
        # (1 + eps) * x_i with eps = 0 (train_eps=False)
        acc_ref[...] = xi_ref[...]

    # neighbor sum: A[i-tile, k-tile] @ x[k-tile]  (bf16 MXU, f32 accumulate)
    acc_ref[...] += jnp.dot(a_ref[...], xk_ref[...].astype(jnp.bfloat16),
                            preferred_element_type=jnp.float32)

    @pl.when(k == pl.num_programs(1) - 1)
    def _():
        agg = acc_ref[...]
        # GIN MLP: Linear -> ReLU -> Linear   (f32; weights are tiny vs A)
        h = jnp.dot(agg, w1_ref[...], preferred_element_type=jnp.float32) + b1_ref[...]
        h = jnp.maximum(h, 0.0)
        h = jnp.dot(h, w2_ref[...], preferred_element_type=jnp.float32) + b2_ref[...]
        h = jnp.maximum(h, 0.0)                    # F.relu after conv
        # F.dropout(p=0.25): identity in eval mode
        if apply_bn:
            inv = jax.lax.rsqrt(var_ref[...] + 1e-5)  # BatchNorm1d eval, eps=1e-5
            h = (h - mean_ref[...]) * inv * gamma_ref[...] + beta_ref[...]
        o_ref[...] = h


def gin_layer(adj, x, w1, b1, w2, b2, gamma, beta, mean, var, apply_bn,
              tm_target=256, tk_target=512):
    np_, fp = x.shape
    hp = w1.shape[1]
    tm = _pick_tile(np_, tm_target, SUB)
    tk = _pick_tile(np_, tk_target, LANE)
    grid = (np_ // tm, np_ // tk)
    kernel = functools.partial(gin_layer_kernel, apply_bn=apply_bn)
    return pl.pallas_call(
        kernel,
        out_shape=jax.ShapeDtypeStruct((np_, hp), jnp.float32),
        grid_spec=pltpu.PrefetchScalarGridSpec(
            num_scalar_prefetch=0,
            grid=grid,
            in_specs=[
                pl.BlockSpec((tm, tk), lambda i, k: (i, k)),   # A tile (bf16)
                pl.BlockSpec((tk, fp), lambda i, k: (k, 0)),   # x source tile
                pl.BlockSpec((tm, fp), lambda i, k: (i, 0)),   # x self tile
                pl.BlockSpec((fp, hp), lambda i, k: (0, 0)),   # w1
                pl.BlockSpec((1, hp), lambda i, k: (0, 0)),    # b1
                pl.BlockSpec((hp, hp), lambda i, k: (0, 0)),   # w2
                pl.BlockSpec((1, hp), lambda i, k: (0, 0)),    # b2
                pl.BlockSpec((1, hp), lambda i, k: (0, 0)),    # gamma
                pl.BlockSpec((1, hp), lambda i, k: (0, 0)),    # beta
                pl.BlockSpec((1, hp), lambda i, k: (0, 0)),    # mean
                pl.BlockSpec((1, hp), lambda i, k: (0, 0)),    # var
            ],
            out_specs=pl.BlockSpec((tm, hp), lambda i, k: (i, 0)),
            scratch_shapes=[pltpu.VMEM((tm, fp), jnp.float32)],
        ),
        compiler_params=pltpu.CompilerParams(
            dimension_semantics=("parallel", "arbitrary"),
            vmem_limit_bytes=VMEM_LIMIT_BYTES,
        ),
    )(adj, x, x, w1, b1, w2, b2, gamma, beta, mean, var)


# ----------------------------------------------------------------------------
# Kernel 2 (fused): global_mean_pool (P @ h, tiled over nodes) + post_mp
#   (two bnb.Linear8bitLt emulated with absmax int8 quant) + log_softmax.
# ----------------------------------------------------------------------------
def pool_post_mp_kernel(p_ref, h_ref, w1q_ref, s1_ref, b1_ref, w2q_ref, s2_ref,
                        b2_ref, emb_ref, ls_ref, logit_ref, acc_ref, *, out_dim):
    k = pl.program_id(0)

    @pl.when(k == 0)
    def _():
        acc_ref[...] = jnp.zeros_like(acc_ref)

    acc_ref[...] += jnp.dot(p_ref[...], h_ref[...],
                            preferred_element_type=jnp.float32)

    @pl.when(k == pl.num_programs(0) - 1)
    def _():
        pooled = acc_ref[...]
        emb16 = pooled.astype(jnp.float16)        # x = x.to(torch.float16); emb = x
        emb_ref[...] = emb16.astype(jnp.float32)  # exact round-trip; cast back outside
        x = emb16.astype(jnp.float32)

        # Linear8bitLt #1: row-wise absmax int8 activation quant, per-output
        # channel int8 weights; int-valued operands are exact in bf16 -> MXU.
        ax = jnp.max(jnp.abs(x), axis=1, keepdims=True)
        sx = jnp.where(ax > 0.0, ax / 127.0, 1.0)
        xq = jnp.clip(jnp.round(x / sx), -127.0, 127.0)
        h1 = jnp.dot(xq.astype(jnp.bfloat16), w1q_ref[...],
                     preferred_element_type=jnp.float32)
        h1 = h1 * sx * s1_ref[...] + b1_ref[...]

        # nn.Dropout(0.25): identity in eval mode
        # Linear8bitLt #2
        ah = jnp.max(jnp.abs(h1), axis=1, keepdims=True)
        sh = jnp.where(ah > 0.0, ah / 127.0, 1.0)
        hq = jnp.clip(jnp.round(h1 / sh), -127.0, 127.0)
        logits = jnp.dot(hq.astype(jnp.bfloat16), w2q_ref[...],
                         preferred_element_type=jnp.float32)
        logits = logits * sh * s2_ref[...] + b2_ref[...]

        # log_softmax over real output columns only (rest is lane padding)
        col = jax.lax.broadcasted_iota(jnp.int32, logits.shape, 1)
        masked = jnp.where(col < out_dim, logits, jnp.full_like(logits, -1e30))
        m = jnp.max(masked, axis=1, keepdims=True)
        lse = jnp.log(jnp.sum(jnp.exp(masked - m), axis=1, keepdims=True)) + m
        ls_ref[...] = logits - lse
        logit_ref[...] = logits


def pool_post_mp(pool_mat, h, w1q, s1, b1, w2q, s2, b2, *, out_dim, tk_target=512):
    gp, np_ = pool_mat.shape
    hp = h.shape[1]
    op = w2q.shape[1]
    tk = _pick_tile(np_, tk_target, LANE)
    grid = (np_ // tk,)
    kernel = functools.partial(pool_post_mp_kernel, out_dim=out_dim)
    return pl.pallas_call(
        kernel,
        out_shape=(jax.ShapeDtypeStruct((gp, hp), jnp.float32),   # emb (f16-rounded)
                   jax.ShapeDtypeStruct((gp, op), jnp.float32),   # log_softmax
                   jax.ShapeDtypeStruct((gp, op), jnp.float32)),  # logits
        grid_spec=pltpu.PrefetchScalarGridSpec(
            num_scalar_prefetch=0,
            grid=grid,
            in_specs=[
                pl.BlockSpec((gp, tk), lambda k: (0, k)),   # pool matrix tile
                pl.BlockSpec((tk, hp), lambda k: (k, 0)),   # node features tile
                pl.BlockSpec((hp, hp), lambda k: (0, 0)),   # w1q (bf16)
                pl.BlockSpec((1, hp), lambda k: (0, 0)),    # s1
                pl.BlockSpec((1, hp), lambda k: (0, 0)),    # b1
                pl.BlockSpec((hp, op), lambda k: (0, 0)),   # w2q (bf16)
                pl.BlockSpec((1, op), lambda k: (0, 0)),    # s2
                pl.BlockSpec((1, op), lambda k: (0, 0)),    # b2
            ],
            out_specs=(pl.BlockSpec((gp, hp), lambda k: (0, 0)),
                       pl.BlockSpec((gp, op), lambda k: (0, 0)),
                       pl.BlockSpec((gp, op), lambda k: (0, 0))),
            scratch_shapes=[pltpu.VMEM((gp, hp), jnp.float32)],
        ),
        compiler_params=pltpu.CompilerParams(
            dimension_semantics=("arbitrary",),
            vmem_limit_bytes=VMEM_LIMIT_BYTES,
        ),
    )(pool_mat, h, w1q, s1, b1, w2q, s2, b2)


# ----------------------------------------------------------------------------
# Glue: params (padded to 128 lanes at init), quantization, forward
# ----------------------------------------------------------------------------
def quantize_linear_weight(w, in_pad, out_pad):
    # w in torch convention (out, in); per-output-channel absmax int8.
    absmax = jnp.max(jnp.abs(w), axis=1, keepdims=True)
    scale = jnp.where(absmax > 0, absmax / 127.0, 1.0)
    wq = jnp.clip(jnp.round(w / scale), -127.0, 127.0)
    wq_pad = _pad2d(wq.T, in_pad, out_pad).astype(jnp.bfloat16)  # exact (|v|<=127)
    s_pad = jnp.ones((1, out_pad), jnp.float32).at[:, :w.shape[0]].set(scale.T)
    return wq_pad, s_pad


def init_params(key, input_dim, hidden_dim, output_dim):
    keys = jax.random.split(key, 16)
    fp = _ceil_to(input_dim, LANE)
    hp = _ceil_to(hidden_dim, LANE)
    op = _ceil_to(output_dim, LANE)

    def lin(k, i, o, scale=0.1):
        kw, kb = jax.random.split(k)
        return (scale * jax.random.normal(kw, (i, o), jnp.float32),
                scale * jax.random.normal(kb, (1, o), jnp.float32))

    convs = []
    idx = 0
    for (din, din_pad) in [(input_dim, fp), (hidden_dim, hp), (hidden_dim, hp)]:
        w1, b1 = lin(keys[idx], din, hidden_dim); idx += 1
        w2, b2 = lin(keys[idx], hidden_dim, hidden_dim); idx += 1
        convs.append(dict(w1=_pad2d(w1, din_pad, hp), b1=_pad2d(b1, 1, hp),
                          w2=_pad2d(w2, hp, hp), b2=_pad2d(b2, 1, hp)))

    norms = []
    for _ in range(2):
        kg, kb = jax.random.split(keys[idx]); idx += 1
        gamma = 1.0 + 0.05 * jax.random.normal(kg, (1, hidden_dim), jnp.float32)
        beta = 0.05 * jax.random.normal(kb, (1, hidden_dim), jnp.float32)
        mean = 0.1 * jax.random.normal(keys[idx], (1, hidden_dim), jnp.float32)
        var = jnp.abs(1.0 + 0.1 * jax.random.normal(keys[idx + 1],
                                                    (1, hidden_dim), jnp.float32))
        idx += 2
        norms.append(dict(
            gamma=_pad2d(gamma, 1, hp),
            beta=_pad2d(beta, 1, hp),
            mean=_pad2d(mean, 1, hp),
            var=jnp.ones((1, hp), jnp.float32).at[:, :hidden_dim].set(var)))

    # post_mp: Linear8bitLt(hidden, hidden) -> Dropout -> Linear8bitLt(hidden, out)
    w_mp1 = 0.1 * jax.random.normal(keys[idx], (hidden_dim, hidden_dim), jnp.float32); idx += 1
    b_mp1 = 0.1 * jax.random.normal(keys[idx], (1, hidden_dim), jnp.float32); idx += 1
    w_mp2 = 0.1 * jax.random.normal(keys[idx], (output_dim, hidden_dim), jnp.float32); idx += 1
    b_mp2 = 0.1 * jax.random.normal(keys[idx], (1, output_dim), jnp.float32); idx += 1
    w1q, s1 = quantize_linear_weight(w_mp1, hp, hp)
    w2q, s2 = quantize_linear_weight(w_mp2, hp, op)
    post_mp = dict(w1q=w1q, s1=s1, b1=_pad2d(b_mp1, 1, hp),
                   w2q=w2q, s2=s2, b2=_pad2d(b_mp2, 1, op))
    return dict(convs=convs, norm=norms, post_mp=post_mp,
                dims=dict(input=input_dim, hidden=hidden_dim, output=output_dim))


def gnn_stack_int8_forward(x, edge_index, batch, params, num_graphs):
    dims = params['dims']
    hidden_dim, output_dim = dims['hidden'], dims['output']
    n, input_dim = x.shape
    np_ = _ceil_to(n, LANE)
    fp = _ceil_to(input_dim, LANE)
    hp = _ceil_to(hidden_dim, LANE)
    gp = _ceil_to(num_graphs, SUB)

    src, dst = edge_index[0], edge_index[1]
    # Dense adjacency A[i, j] = #edges j -> i  (GIN sum aggregation = A @ x).
    # TODO(synk): replace with a CSR gather kernel for large sparse graphs.
    adj = jnp.zeros((np_, np_), jnp.float32).at[dst, src].add(1.0)
    adj = adj.astype(jnp.bfloat16)   # exact while per-pair edge multiplicity < 256

    h = _pad2d(x.astype(jnp.float32), np_, fp)

    identity_bn = dict(gamma=jnp.ones((1, hp), jnp.float32),
                       beta=jnp.zeros((1, hp), jnp.float32),
                       mean=jnp.zeros((1, hp), jnp.float32),
                       var=jnp.ones((1, hp), jnp.float32))
    for i in range(3):
        p = params['convs'][i]
        apply_bn = (i != 2)
        bn = params['norm'][i] if apply_bn else identity_bn
        h = gin_layer(adj, h, p['w1'], p['b1'], p['w2'], p['b2'],
                      bn['gamma'], bn['beta'], bn['mean'], bn['var'], apply_bn)

    # global_mean_pool(x, batch) as P @ h, fused with post_mp + log_softmax.
    batch_pad = jnp.full((np_,), -1, jnp.int32).at[:n].set(batch.astype(jnp.int32))
    onehot = (batch_pad[None, :] ==
              jnp.arange(gp, dtype=jnp.int32)[:, None]).astype(jnp.float32)
    counts = jnp.maximum(jnp.sum(onehot, axis=1, keepdims=True), 1.0)
    pool_mat = onehot / counts

    mp = params['post_mp']
    emb_full, ls_full, logit_full = pool_post_mp(
        pool_mat, h, mp['w1q'], mp['s1'], mp['b1'], mp['w2q'], mp['s2'], mp['b2'],
        out_dim=output_dim)

    emb = emb_full[:num_graphs, :hidden_dim].astype(jnp.float16)
    out = ls_full[:num_graphs, :output_dim].astype(jnp.float16)
    logits = logit_full[:num_graphs, :output_dim].astype(jnp.float16)
    return emb, out, logits


if __name__ == "__main__":
    key = jax.random.PRNGKey(0)
    k_x, k_p = jax.random.split(key, 2)

    input_dim, hidden_dim, output_dim = 16, 32, 2
    nodes_per_graph, num_graphs = 8, 2
    n_nodes = nodes_per_graph * num_graphs

    x = jax.random.normal(k_x, (n_nodes, input_dim), jnp.float32)

    # Deterministic edges: bidirectional ring inside each graph.
    src, dst = [], []
    for g in range(num_graphs):
        base = g * nodes_per_graph
        for i in range(nodes_per_graph):
            a, b = base + i, base + (i + 1) % nodes_per_graph
            src += [a, b]
            dst += [b, a]
    edge_index = jnp.array([src, dst], dtype=jnp.int32)
    batch = jnp.repeat(jnp.arange(num_graphs, dtype=jnp.int32), nodes_per_graph)

    params = init_params(k_p, input_dim, hidden_dim, output_dim)

    emb, out, logits = gnn_stack_int8_forward(x, edge_index, batch, params, num_graphs)
    jax.block_until_ready((emb, out, logits))

    assert emb.shape == (num_graphs, hidden_dim) and emb.dtype == jnp.float16
    assert out.shape == (num_graphs, output_dim) and out.dtype == jnp.float16
    assert logits.shape == (num_graphs, output_dim) and logits.dtype == jnp.float16
    print("KERNEL_OK")
</pallas_src>

<mosaic_0001>
module attributes {stable_mosaic.version = 11 : i64} {
  func.func @gin_layer_kernel(%arg0: i32, %arg1: i32, %arg2: memref<128x128xbf16, #tpu.memory_space<vmem>>, %arg3: memref<128x128xf32, #tpu.memory_space<vmem>>, %arg4: memref<128x128xf32, #tpu.memory_space<vmem>>, %arg5: memref<128x128xf32, #tpu.memory_space<vmem>>, %arg6: memref<1x128xf32, #tpu.memory_space<vmem>>, %arg7: memref<128x128xf32, #tpu.memory_space<vmem>>, %arg8: memref<1x128xf32, #tpu.memory_space<vmem>>, %arg9: memref<1x128xf32, #tpu.memory_space<vmem>>, %arg10: memref<1x128xf32, #tpu.memory_space<vmem>>, %arg11: memref<1x128xf32, #tpu.memory_space<vmem>>, %arg12: memref<1x128xf32, #tpu.memory_space<vmem>>, %arg13: memref<128x128xf32, #tpu.memory_space<vmem>>, %arg14: memref<128x128xf32, #tpu.memory_space<vmem>>) attributes {dimension_semantics = [#tpu.dimension_semantics<parallel>, #tpu.dimension_semantics<arbitrary>], iteration_bounds = array<i64: 1, 1>, scalar_prefetch = 0 : i64, scratch_operands = 1 : i64, tpu.core_type = #tpu.core_type<tc>, window_params = [{transform_indices = @transform_0, window_bounds = array<i64: 128, 128>}, {transform_indices = @transform_1, window_bounds = array<i64: 128, 128>}, {transform_indices = @transform_2, window_bounds = array<i64: 128, 128>}, {pipeline_mode = #tpu.pipeline_mode<synchronous>, transform_indices = @transform_3, window_bounds = array<i64: 128, 128>}, {pipeline_mode = #tpu.pipeline_mode<synchronous>, transform_indices = @transform_4, window_bounds = array<i64: 1, 128>}, {pipeline_mode = #tpu.pipeline_mode<synchronous>, transform_indices = @transform_5, window_bounds = array<i64: 128, 128>}, {pipeline_mode = #tpu.pipeline_mode<synchronous>, transform_indices = @transform_6, window_bounds = array<i64: 1, 128>}, {pipeline_mode = #tpu.pipeline_mode<synchronous>, transform_indices = @transform_7, window_bounds = array<i64: 1, 128>}, {pipeline_mode = #tpu.pipeline_mode<synchronous>, transform_indices = @transform_8, window_bounds = array<i64: 1, 128>}, {pipeline_mode = #tpu.pipeline_mode<synchronous>, transform_indices = @transform_9, window_bounds = array<i64: 1, 128>}, {pipeline_mode = #tpu.pipeline_mode<synchronous>, transform_indices = @transform_10, window_bounds = array<i64: 1, 128>}, {transform_indices = @transform_11, window_bounds = array<i64: 128, 128>}]} {
    %c0_i32 = arith.constant 0 : i32
    %0 = arith.cmpi eq, %arg1, %c0_i32 : i32
    %1 = arith.extui %0 : i1 to i32
    %c0_i32_0 = arith.constant 0 : i32
    %2 = arith.cmpi ne, %1, %c0_i32_0 : i32
    scf.if %2 {
      %c0_10 = arith.constant 0 : index
      %c0_11 = arith.constant 0 : index
      %13 = vector.load %arg4[%c0_10, %c0_11] : memref<128x128xf32, #tpu.memory_space<vmem>>, vector<128x128xf32>
      %c0_12 = arith.constant 0 : index
      %c0_13 = arith.constant 0 : index
      %14 = vector.load %arg14[%c0_12, %c0_13] : memref<128x128xf32, #tpu.memory_space<vmem>>, vector<128x128xf32>
      tpu.vector_store %arg14[%c0_12, %c0_13], %13 {strides = array<i32>} : memref<128x128xf32, #tpu.memory_space<vmem>>, vector<128x128xf32>,
    } else {
    }
    %c0 = arith.constant 0 : index
    %c0_1 = arith.constant 0 : index
    %3 = vector.load %arg14[%c0, %c0_1] : memref<128x128xf32, #tpu.memory_space<vmem>>, vector<128x128xf32>
    %c0_2 = arith.constant 0 : index
    %c0_3 = arith.constant 0 : index
    %4 = vector.load %arg2[%c0_2, %c0_3] : memref<128x128xbf16, #tpu.memory_space<vmem>>, vector<128x128xbf16>
    %c0_4 = arith.constant 0 : index
    %c0_5 = arith.constant 0 : index
    %5 = vector.load %arg3[%c0_4, %c0_5] : memref<128x128xf32, #tpu.memory_space<vmem>>, vector<128x128xf32>
    %6 = arith.truncf %5 : vector<128x128xf32> to vector<128x128xbf16>
    %cst = arith.constant dense<0.000000e+00> : vector<128x128xf32>
    %7 = tpu.matmul %4, %6, %cst {dimension_numbers = #tpu.dot_dimension_numbers<[1], [0], [0], [1], [0, 0, 1, 1], [], []>} : vector<128x128xbf16>, vector<128x128xbf16>, vector<128x128xf32> -> vector<128x128xf32>
    %8 = arith.addf %3, %7 : vector<128x128xf32>
    %c0_6 = arith.constant 0 : index
    %c0_7 = arith.constant 0 : index
    %9 = vector.load %arg14[%c0_6, %c0_7] : memref<128x128xf32, #tpu.memory_space<vmem>>, vector<128x128xf32>
    tpu.vector_store %arg14[%c0_6, %c0_7], %8 {strides = array<i32>} : memref<128x128xf32, #tpu.memory_space<vmem>>, vector<128x128xf32>,
    %c0_i32_8 = arith.constant 0 : i32
    %10 = arith.cmpi eq, %arg1, %c0_i32_8 : i32
    %11 = arith.extui %10 : i1 to i32
    %c0_i32_9 = arith.constant 0 : i32
    %12 = arith.cmpi ne, %11, %c0_i32_9 : i32
    scf.if %12 {
      %c0_10 = arith.constant 0 : index
      %c0_11 = arith.constant 0 : index
      %13 = vector.load %arg14[%c0_10, %c0_11] : memref<128x128xf32, #tpu.memory_space<vmem>>, vector<128x128xf32>
      %c0_12 = arith.constant 0 : index
      %c0_13 = arith.constant 0 : index
      %14 = vector.load %arg5[%c0_12, %c0_13] : memref<128x128xf32, #tpu.memory_space<vmem>>, vector<128x128xf32>
      %cst_14 = arith.constant dense<0.000000e+00> : vector<128x128xf32>
      %15 = tpu.matmul %13, %14, %cst_14 {dimension_numbers = #tpu.dot_dimension_numbers<[1], [0], [0], [1], [0, 0, 1, 1], [], []>} : vector<128x128xf32>, vector<128x128xf32>, vector<128x128xf32> -> vector<128x128xf32>
      %c0_15 = arith.constant 0 : index
      %c0_16 = arith.constant 0 : index
      %16 = vector.load %arg6[%c0_15, %c0_16] : memref<1x128xf32, #tpu.memory_space<vmem>>, vector<1x128xf32>
      %17 = vector.broadcast %16 : vector<1x128xf32> to vector<128x128xf32>
      %18 = arith.addf %15, %17 : vector<128x128xf32>
      %cst_17 = arith.constant 0.000000e+00 : f32
      %19 = vector.broadcast %cst_17 : f32 to vector<128x128xf32>
      %20 = arith.maximumf %18, %19 : vector<128x128xf32>
      %c0_18 = arith.constant 0 : index
      %c0_19 = arith.constant 0 : index
      %21 = vector.load %arg7[%c0_18, %c0_19] : memref<128x128xf32, #tpu.memory_space<vmem>>, vector<128x128xf32>
      %cst_20 = arith.constant dense<0.000000e+00> : vector<128x128xf32>
      %22 = tpu.matmul %20, %21, %cst_20 {dimension_numbers = #tpu.dot_dimension_numbers<[1], [0], [0], [1], [0, 0, 1, 1], [], []>} : vector<128x128xf32>, vector<128x128xf32>, vector<128x128xf32> -> vector<128x128xf32>
      %c0_21 = arith.constant 0 : index
      %c0_22 = arith.constant 0 : index
      %23 = vector.load %arg8[%c0_21, %c0_22] : memref<1x128xf32, #tpu.memory_space<vmem>>, vector<1x128xf32>
      %24 = vector.broadcast %23 : vector<1x128xf32> to vector<128x128xf32>
      %25 = arith.addf %22, %24 : vector<128x128xf32>
      %cst_23 = arith.constant 0.000000e+00 : f32
      %26 = vector.broadcast %cst_23 : f32 to vector<128x128xf32>
      %27 = arith.maximumf %25, %26 : vector<128x128xf32>
      %c0_24 = arith.constant 0 : index
      %c0_25 = arith.constant 0 : index
      %28 = vector.load %arg12[%c0_24, %c0_25] : memref<1x128xf32, #tpu.memory_space<vmem>>, vector<1x128xf32>
      %cst_26 = arith.constant 9.99999974E-6 : f32
      %29 = vector.broadcast %cst_26 : f32 to vector<1x128xf32>
      %30 = arith.addf %28, %29 : vector<1x128xf32>
      %31 = math.rsqrt %30 : vector<1x128xf32>
      %c0_27 = arith.constant 0 : index
      %c0_28 = arith.constant 0 : index
      %32 = vector.load %arg11[%c0_27, %c0_28] : memref<1x128xf32, #tpu.memory_space<vmem>>, vector<1x128xf32>
      %33 = vector.broadcast %32 : vector<1x128xf32> to vector<128x128xf32>
      %34 = arith.subf %27, %33 : vector<128x128xf32>
      %35 = vector.broadcast %31 : vector<1x128xf32> to vector<128x128xf32>
      %36 = arith.mulf %34, %35 : vector<128x128xf32>
      %c0_29 = arith.constant 0 : index
      %c0_30 = arith.constant 0 : index
      %37 = vector.load %arg9[%c0_29, %c0_30] : memref<1x128xf32, #tpu.memory_space<vmem>>, vector<1x128xf32>
      %38 = vector.broadcast %37 : vector<1x128xf32> to vector<128x128xf32>
      %39 = arith.mulf %36, %38 : vector<128x128xf32>
      %c0_31 = arith.constant 0 : index
      %c0_32 = arith.constant 0 : index
      %40 = vector.load %arg10[%c0_31, %c0_32] : memref<1x128xf32, #tpu.memory_space<vmem>>, vector<1x128xf32>
      %41 = vector.broadcast %40 : vector<1x128xf32> to vector<128x128xf32>
      %42 = arith.addf %39, %41 : vector<128x128xf32>
      %c0_33 = arith.constant 0 : index
      %c0_34 = arith.constant 0 : index
      %43 = vector.load %arg13[%c0_33, %c0_34] : memref<128x128xf32, #tpu.memory_space<vmem>>, vector<128x128xf32>
      tpu.vector_store %arg13[%c0_33, %c0_34], %42 {strides = array<i32>} : memref<128x128xf32, #tpu.memory_space<vmem>>, vector<128x128xf32>,
    } else {
    }
    return
  }
  func.func @transform_0(%arg0: i32, %arg1: i32) -> (i32, i32) {
    %c0_i32 = arith.constant 0 : i32
    return %arg0, %arg1 : i32, i32
  }
  func.func @transform_1(%arg0: i32, %arg1: i32) -> (i32, i32) {
    %c0_i32 = arith.constant 0 : i32
    %c0_i32_0 = arith.constant 0 : i32
    return %arg1, %c0_i32 : i32, i32
  }
  func.func @transform_2(%arg0: i32, %arg1: i32) -> (i32, i32) {
    %c0_i32 = arith.constant 0 : i32
    %c0_i32_0 = arith.constant 0 : i32
    return %arg0, %c0_i32 : i32, i32
  }
  func.func @transform_3(%arg0: i32, %arg1: i32) -> (i32, i32) {
    %c0_i32 = arith.constant 0 : i32
    %c0_i32_0 = arith.constant 0 : i32
    %c0_i32_1 = arith.constant 0 : i32
    return %c0_i32, %c0_i32_0 : i32, i32
  }
  func.func @transform_4(%arg0: i32, %arg1: i32) -> (i32, i32) {
    %c0_i32 = arith.constant 0 : i32
    %c0_i32_0 = arith.constant 0 : i32
    %c0_i32_1 = arith.constant 0 : i32
    return %c0_i32, %c0_i32_0 : i32, i32
  }
  func.func @transform_5(%arg0: i32, %arg1: i32) -> (i32, i32) {
    %c0_i32 = arith.constant 0 : i32
    %c0_i32_0 = arith.constant 0 : i32
    %c0_i32_1 = arith.constant 0 : i32
    return %c0_i32, %c0_i32_0 : i32, i32
  }
  func.func @transform_6(%arg0: i32, %arg1: i32) -> (i32, i32) {
    %c0_i32 = arith.constant 0 : i32
    %c0_i32_0 = arith.constant 0 : i32
    %c0_i32_1 = arith.constant 0 : i32
    return %c0_i32, %c0_i32_0 : i32, i32
  }
  func.func @transform_7(%arg0: i32, %arg1: i32) -> (i32, i32) {
    %c0_i32 = arith.constant 0 : i32
    %c0_i32_0 = arith.constant 0 : i32
    %c0_i32_1 = arith.constant 0 : i32
    return %c0_i32, %c0_i32_0 : i32, i32
  }
  func.func @transform_8(%arg0: i32, %arg1: i32) -> (i32, i32) {
    %c0_i32 = arith.constant 0 : i32
    %c0_i32_0 = arith.constant 0 : i32
    %c0_i32_1 = arith.constant 0 : i32
    return %c0_i32, %c0_i32_0 : i32, i32
  }
  func.func @transform_9(%arg0: i32, %arg1: i32) -> (i32, i32) {
    %c0_i32 = arith.constant 0 : i32
    %c0_i32_0 = arith.constant 0 : i32
    %c0_i32_1 = arith.constant 0 : i32
    return %c0_i32, %c0_i32_0 : i32, i32
  }
  func.func @transform_10(%arg0: i32, %arg1: i32) -> (i32, i32) {
    %c0_i32 = arith.constant 0 : i32
    %c0_i32_0 = arith.constant 0 : i32
    %c0_i32_1 = arith.constant 0 : i32
    return %c0_i32, %c0_i32_0 : i32, i32
  }
  func.func @transform_11(%arg0: i32, %arg1: i32) -> (i32, i32) {
    %c0_i32 = arith.constant 0 : i32
    %c0_i32_0 = arith.constant 0 : i32
    return %arg0, %c0_i32 : i32, i32
  }
}

</mosaic_0001>

<llo_original>
// kernel: tpu_custom_call.1
$region0: #{tpu_custom_call.1}
  #allocation0 [shape = 'u32[]', space=smem, size = 0x4, offset = 0x4, fixed_abs, tag = 'smem constant byte address 0x4 - core index']
  #allocation1 [shape = 'u32[144,128]{1,0:T(1,128)}', space=vmem, size = 0x12000, scoped, tag = 'internal scratch']
  #allocation2 [shape = 'f32[128,128]{1,0:T(8,128)}', space=vmem, size = 0x10000, scoped, tag = 'scratch operand']
  %s0 = inlined_call_operand.hbm [shape: bf16[128,128], index: 0, kind: input, shape index: {}]
  %s1 = inlined_call_operand.hbm [shape: f32[128,128], index: 1, kind: input, shape index: {}]
  %s2 = inlined_call_operand.hbm [shape: f32[128,128], index: 2, kind: input, shape index: {}]
  %s3 = inlined_call_operand.hbm [shape: f32[128,128], index: 3, kind: input, shape index: {}]
  %s4 = inlined_call_operand.vmem [shape: f32[1,128], index: 4, kind: input, shape index: {}]
  %s5 = inlined_call_operand.hbm [shape: f32[128,128], index: 5, kind: input, shape index: {}]
  %s6 = inlined_call_operand.vmem [shape: f32[1,128], index: 6, kind: input, shape index: {}]
  %s7 = inlined_call_operand.vmem [shape: f32[1,128], index: 7, kind: input, shape index: {}]
  %s8 = inlined_call_operand.vmem [shape: f32[1,128], index: 8, kind: input, shape index: {}]
  %s9 = inlined_call_operand.vmem [shape: f32[1,128], index: 9, kind: input, shape index: {}]
  %s10 = inlined_call_operand.vmem [shape: f32[1,128], index: 10, kind: input, shape index: {}]
  %s11 = inlined_call_operand.hbm [shape: f32[128,128], index: 11, kind: output, shape index: {}]
  %s12 = sld [smem:[#allocation0]]
  $region82: #{tpu_custom_call.1} parent=0
    _
  %s14 = ssub.s32 1, %s12
  %s15 = scalar_select 0, %s14, %s12
  $region1: #{tpu_custom_call.1} parent=0
    #allocation3 [shape = 'u8[32768]{0}', space=vmem, size = 0x8000, scoped, tag = 'input window, operand 0, single buffered']
    #allocation4 [shape = 's32[1]{0}', space=sflag, size = 0x4, scoped, tag = 'scoped memory for tpu_custom_call.1']
    #allocation5 [shape = 's32[1]{0}', space=sflag, size = 0x4, scoped, tag = 'scoped memory for tpu_custom_call.1']
    #allocation6 [shape = 'u8[65536]{0}', space=vmem, size = 0x10000, scoped, tag = 'input window, operand 1, single buffered']
    #allocation7 [shape = 's32[1]{0}', space=sflag, size = 0x4, scoped, tag = 'scoped memory for tpu_custom_call.1']
    #allocation8 [shape = 'u8[65536]{0}', space=vmem, size = 0x10000, scoped, tag = 'input window, operand 2, single buffered']
    #allocation9 [shape = 'u8[65536]{0}', space=vmem, size = 0x10000, scoped, tag = 'input window, operand 3, single buffered']
    #allocation10 [shape = 's32[1]{0}', space=sflag, size = 0x4, scoped, tag = 'scoped memory for tpu_custom_call.1']
    #allocation11 [shape = 'u8[65536]{0}', space=vmem, size = 0x10000, scoped, tag = 'input window, operand 5, single buffered']
    #allocation12 [shape = 'u8[65536]{0}', space=vmem, size = 0x10000, scoped, tag = 'output window, operand 0, single buffered']
    %16 = vsyncpa [#allocation4], 0
    %17 = vsyncpa [#allocation7], 0
    %18 = vsyncpa [#allocation10], 0
    %19 = vsyncpa [#allocation5], 0
    // Predicated region
    $region2: #{tpu_custom_call.1} parent=1 // pred_check
      _
    $region3: #{tpu_custom_call.1} parent=1 // pred_check_branch
      %21 = sbr.rel (0) target = $region5
    $region4: #{tpu_custom_call.1} parent=1 // pred_region
      %s23 = ssub.s32 1024, 1024
      %24 = vsyncadd [#allocation4], %s23
      %s25 = sshll.u32 [#allocation3], 4
      %s26 = int_to_ptr.vmem [resolvable:$true] %s25
      %31 = dma.hbm_to_vmem [thread:$0]  %s0, 1024, %s26, [#allocation4], 64, 64, 4
    $region5: #{tpu_custom_call.1} parent=1 // pred_fallthru
      _
    // Predicated region
    $region6: #{tpu_custom_call.1} parent=1 // pred_check
      _
    $region7: #{tpu_custom_call.1} parent=1 // pred_check_branch
      %33 = sbr.rel (0) target = $region9
    $region8: #{tpu_custom_call.1} parent=1 // pred_region
      %s35 = ssub.s32 2048, 2048
      %36 = vsyncadd [#allocation7], %s35
      %s37 = sshll.u32 [#allocation6], 4
      %s38 = int_to_ptr.vmem [resolvable:$true] %s37
      %43 = dma.hbm_to_vmem [thread:$0]  %s1, 2048, %s38, [#allocation7], 128, 128, 8
    $region9: #{tpu_custom_call.1} parent=1 // pred_fallthru
      _
    // Predicated region
    $region10: #{tpu_custom_call.1} parent=1 // pred_check
      _
    $region11: #{tpu_custom_call.1} parent=1 // pred_check_branch
      %45 = sbr.rel (0) target = $region13
    $region12: #{tpu_custom_call.1} parent=1 // pred_region
      %s47 = ssub.s32 2048, 2048
      %48 = vsyncadd [#allocation7], %s47
      %s49 = sshll.u32 [#allocation8], 4
      %s50 = int_to_ptr.vmem [resolvable:$true] %s49
      %55 = dma.hbm_to_vmem [thread:$0]  %s2, 2048, %s50, [#allocation7], 128, 128, 8
    $region13: #{tpu_custom_call.1} parent=1 // pred_fallthru
      _
    // Predicated region
    $region14: #{tpu_custom_call.1} parent=1 // pred_check
      _
    $region15: #{tpu_custom_call.1} parent=1 // pred_check_branch
      %57 = sbr.rel (0) target = $region17
    $region16: #{tpu_custom_call.1} parent=1 // pred_region
      %s59 = ssub.s32 2048, 2048
      %60 = vsyncadd [#allocation10], %s59
      %s61 = sshll.u32 [#allocation9], 4
      %s62 = int_to_ptr.vmem [resolvable:$true] %s61
      %67 = dma.hbm_to_vmem [thread:$0]  %s3, 2048, %s62, [#allocation10], 128, 128, 8
    $region17: #{tpu_custom_call.1} parent=1 // pred_fallthru
      _
    // Predicated region
    $region18: #{tpu_custom_call.1} parent=1 // pred_check
      _
    $region19: #{tpu_custom_call.1} parent=1 // pred_check_branch
      %69 = sbr.rel (0) target = $region21
    $region20: #{tpu_custom_call.1} parent=1 // pred_region
      _
    $region21: #{tpu_custom_call.1} parent=1 // pred_fallthru
      _
    // Predicated region
    $region22: #{tpu_custom_call.1} parent=1 // pred_check
      _
    $region23: #{tpu_custom_call.1} parent=1 // pred_check_branch
      %71 = sbr.rel (0) target = $region25
    $region24: #{tpu_custom_call.1} parent=1 // pred_region
      %s73 = ssub.s32 2048, 2048
      %74 = vsyncadd [#allocation10], %s73
      %s75 = sshll.u32 [#allocation11], 4
      %s76 = int_to_ptr.vmem [resolvable:$true] %s75
      %81 = dma.hbm_to_vmem [thread:$0]  %s5, 2048, %s76, [#allocation10], 128, 128, 8
    $region25: #{tpu_custom_call.1} parent=1 // pred_fallthru
      _
    // Predicated region
    $region26: #{tpu_custom_call.1} parent=1 // pred_check
      _
    $region27: #{tpu_custom_call.1} parent=1 // pred_check_branch
      %83 = sbr.rel (0) target = $region29
    $region28: #{tpu_custom_call.1} parent=1 // pred_region
      _
    $region29: #{tpu_custom_call.1} parent=1 // pred_fallthru
      _
    // Predicated region
    $region30: #{tpu_custom_call.1} parent=1 // pred_check
      _
    $region31: #{tpu_custom_call.1} parent=1 // pred_check_branch
      %85 = sbr.rel (0) target = $region33
    $region32: #{tpu_custom_call.1} parent=1 // pred_region
      _
    $region33: #{tpu_custom_call.1} parent=1 // pred_fallthru
      _
    // Predicated region
    $region34: #{tpu_custom_call.1} parent=1 // pred_check
      _
    $region35: #{tpu_custom_call.1} parent=1 // pred_check_branch
      %87 = sbr.rel (0) target = $region37
    $region36: #{tpu_custom_call.1} parent=1 // pred_region
      _
    $region37: #{tpu_custom_call.1} parent=1 // pred_fallthru
      _
    // Predicated region
    $region38: #{tpu_custom_call.1} parent=1 // pred_check
      _
    $region39: #{tpu_custom_call.1} parent=1 // pred_check_branch
      %89 = sbr.rel (0) target = $region41
    $region40: #{tpu_custom_call.1} parent=1 // pred_region
      _
    $region41: #{tpu_custom_call.1} parent=1 // pred_fallthru
      _
    // Predicated region
    $region42: #{tpu_custom_call.1} parent=1 // pred_check
      _
    $region43: #{tpu_custom_call.1} parent=1 // pred_check_branch
      %91 = sbr.rel (0) target = $region45
    $region44: #{tpu_custom_call.1} parent=1 // pred_region
      _
    $region45: #{tpu_custom_call.1} parent=1 // pred_fallthru
      _
    // Predicated region
    $region46: #{tpu_custom_call.1} parent=1 // pred_check
      _
    $region47: #{tpu_custom_call.1} parent=1 // pred_check_branch
      %93 = sbr.rel (0) target = $region49
    $region48: #{tpu_custom_call.1} parent=1 // pred_region
      %94 = dma.done [#allocation4], 1024
    $region49: #{tpu_custom_call.1} parent=1 // pred_fallthru
      _
    // Predicated region
    $region50: #{tpu_custom_call.1} parent=1 // pred_check
      _
    $region51: #{tpu_custom_call.1} parent=1 // pred_check_branch
      %96 = sbr.rel (0) target = $region53
    $region52: #{tpu_custom_call.1} parent=1 // pred_region
      %97 = dma.done [#allocation7], 2048
    $region53: #{tpu_custom_call.1} parent=1 // pred_fallthru
      _
    // Predicated region
    $region54: #{tpu_custom_call.1} parent=1 // pred_check
      _
    $region55: #{tpu_custom_call.1} parent=1 // pred_check_branch
      %99 = sbr.rel (0) target = $region57
    $region56: #{tpu_custom_call.1} parent=1 // pred_region
      %100 = dma.done [#allocation7], 2048
    $region57: #{tpu_custom_call.1} parent=1 // pred_fallthru
      _
    // Predicated region
    $region58: #{tpu_custom_call.1} parent=1 // pred_check
      _
    $region59: #{tpu_custom_call.1} parent=1 // pred_check_branch
      %102 = sbr.rel (0) target = $region61
    $region60: #{tpu_custom_call.1} parent=1 // pred_region
      %103 = dma.done [#allocation10], 2048
    $region61: #{tpu_custom_call.1} parent=1 // pred_fallthru
      _
    // Predicated region
    $region62: #{tpu_custom_call.1} parent=1 // pred_check
      _
    $region63: #{tpu_custom_call.1} parent=1 // pred_check_branch
      %105 = sbr.rel (0) target = $region65
    $region64: #{tpu_custom_call.1} parent=1 // pred_region
      %106 = dma.done [#allocation10], 2048
    $region65: #{tpu_custom_call.1} parent=1 // pred_fallthru
      _
    %p108 = scmp.eq.s32.totalorder 0, 0
    // Predicated region
    $region66: #{tpu_custom_call.1} parent=1 // pred_check
      %p109 = pneg %p108
    $region67: #{tpu_custom_call.1} parent=1 // pred_check_branch
      %111 = sbr.rel (%p109) target = $region69
    $region68: #{tpu_custom_call.1} parent=1 // pred_region
      %v112 = vld [vmem:[#allocation8] sm:$0xff]
      %v113 = vld [vmem:[#allocation8 + $0x8] sm:$0xff]
      %v114 = vld [vmem:[#allocation8 + $0x10] sm:$0xff]
      %v115 = vld [vmem:[#allocation8 + $0x18] sm:$0xff]
      %v116 = vld [vmem:[#allocation8 + $0x20] sm:$0xff]
      %v117 = vld [vmem:[#allocation8 + $0x28] sm:$0xff]
      %v118 = vld [vmem:[#allocation8 + $0x30] sm:$0xff]
      %v119 = vld [vmem:[#allocation8 + $0x38] sm:$0xff]
      %v120 = vld [vmem:[#allocation8 + $0x40] sm:$0xff]
      %v121 = vld [vmem:[#allocation8 + $0x48] sm:$0xff]
      %v122 = vld [vmem:[#allocation8 + $0x50] sm:$0xff]
      %v123 = vld [vmem:[#allocation8 + $0x58] sm:$0xff]
      %v124 = vld [vmem:[#allocation8 + $0x60] sm:$0xff]
      %v125 = vld [vmem:[#allocation8 + $0x68] sm:$0xff]
      %v126 = vld [vmem:[#allocation8 + $0x70] sm:$0xff]
      %v127 = vld [vmem:[#allocation8 + $0x78] sm:$0xff]
      %128 = vst [vmem:[#allocation2] sm:$0xff] %v112
      %129 = vst [vmem:[#allocation2 + $0x8] sm:$0xff] %v113
      %130 = vst [vmem:[#allocation2 + $0x10] sm:$0xff] %v114
      %131 = vst [vmem:[#allocation2 + $0x18] sm:$0xff] %v115
      %132 = vst [vmem:[#allocation2 + $0x20] sm:$0xff] %v116
      %133 = vst [vmem:[#allocation2 + $0x28] sm:$0xff] %v117
      %134 = vst [vmem:[#allocation2 + $0x30] sm:$0xff] %v118
      %135 = vst [vmem:[#allocation2 + $0x38] sm:$0xff] %v119
      %136 = vst [vmem:[#allocation2 + $0x40] sm:$0xff] %v120
      %137 = vst [vmem:[#allocation2 + $0x48] sm:$0xff] %v121
      %138 = vst [vmem:[#allocation2 + $0x50] sm:$0xff] %v122
      %139 = vst [vmem:[#allocation2 + $0x58] sm:$0xff] %v123
      %140 = vst [vmem:[#allocation2 + $0x60] sm:$0xff] %v124
      %141 = vst [vmem:[#allocation2 + $0x68] sm:$0xff] %v125
      %142 = vst [vmem:[#allocation2 + $0x70] sm:$0xff] %v126
      %143 = vst [vmem:[#allocation2 + $0x78] sm:$0xff] %v127
    $region69: #{tpu_custom_call.1} parent=1 // pred_fallthru
      _
    %v144 = vld [vmem:[#allocation2] sm:$0xff]
    %v145 = vld [vmem:[#allocation2 + $0x8] sm:$0xff]
    %v146 = vld [vmem:[#allocation2 + $0x10] sm:$0xff]
    %v147 = vld [vmem:[#allocation2 + $0x18] sm:$0xff]
    %v148 = vld [vmem:[#allocation2 + $0x20] sm:$0xff]
    %v149 = vld [vmem:[#allocation2 + $0x28] sm:$0xff]
    %v150 = vld [vmem:[#allocation2 + $0x30] sm:$0xff]
    %v151 = vld [vmem:[#allocation2 + $0x38] sm:$0xff]
    %v152 = vld [vmem:[#allocation2 + $0x40] sm:$0xff]
    %v153 = vld [vmem:[#allocation2 + $0x48] sm:$0xff]
    %v154 = vld [vmem:[#allocation2 + $0x50] sm:$0xff]
    %v155 = vld [vmem:[#allocation2 + $0x58] sm:$0xff]
    %v156 = vld [vmem:[#allocation2 + $0x60] sm:$0xff]
    %v157 = vld [vmem:[#allocation2 + $0x68] sm:$0xff]
    %v158 = vld [vmem:[#allocation2 + $0x70] sm:$0xff]
    %v159 = vld [vmem:[#allocation2 + $0x78] sm:$0xff]
    %v160 = vld [vmem:[#allocation3] sm:$0xf]
    %v161 = vld [vmem:[#allocation3 + $0x4] sm:$0xf]
    %v162 = vld [vmem:[#allocation3 + $0x8] sm:$0xf]
    %v163 = vld [vmem:[#allocation3 + $0xc] sm:$0xf]
    %v164 = vld [vmem:[#allocation3 + $0x10] sm:$0xf]
    %v165 = vld [vmem:[#allocation3 + $0x14] sm:$0xf]
    %v166 = vld [vmem:[#allocation3 + $0x18] sm:$0xf]
    %v167 = vld [vmem:[#allocation3 + $0x1c] sm:$0xf]
    %v168 = vld [vmem:[#allocation3 + $0x20] sm:$0xf]
    %v169 = vld [vmem:[#allocation3 + $0x24] sm:$0xf]
    %v170 = vld [vmem:[#allocation3 + $0x28] sm:$0xf]
    %v171 = vld [vmem:[#allocation3 + $0x2c] sm:$0xf]
    %v172 = vld [vmem:[#allocation3 + $0x30] sm:$0xf]
    %v173 = vld [vmem:[#allocation3 + $0x34] sm:$0xf]
    %v174 = vld [vmem:[#allocation3 + $0x38] sm:$0xf]
    %v175 = vld [vmem:[#allocation3 + $0x3c] sm:$0xf]
    %v176 = vld [vmem:[#allocation6] sm:$0xff]
    %v177 = vld [vmem:[#allocation6 + $0x8] sm:$0xff]
    %v178 = vld [vmem:[#allocation6 + $0x10] sm:$0xff]
    %v179 = vld [vmem:[#allocation6 + $0x18] sm:$0xff]
    %v180 = vld [vmem:[#allocation6 + $0x20] sm:$0xff]
    %v181 = vld [vmem:[#allocation6 + $0x28] sm:$0xff]
    %v182 = vld [vmem:[#allocation6 + $0x30] sm:$0xff]
    %v183 = vld [vmem:[#allocation6 + $0x38] sm:$0xff]
    %v184 = vld [vmem:[#allocation6 + $0x40] sm:$0xff]
    %v185 = vld [vmem:[#allocation6 + $0x48] sm:$0xff]
    %v186 = vld [vmem:[#allocation6 + $0x50] sm:$0xff]
    %v187 = vld [vmem:[#allocation6 + $0x58] sm:$0xff]
    %v188 = vld [vmem:[#allocation6 + $0x60] sm:$0xff]
    %v189 = vld [vmem:[#allocation6 + $0x68] sm:$0xff]
    %v190 = vld [vmem:[#allocation6 + $0x70] sm:$0xff]
    %v191 = vld [vmem:[#allocation6 + $0x78] sm:$0xff]
    %v192 = vpack.c.bf16 %v177, %v176
    %v193 = vpack.c.bf16 %v179, %v178
    %v194 = vpack.c.bf16 %v181, %v180
    %v195 = vpack.c.bf16 %v183, %v182
    %v196 = vpack.c.bf16 %v185, %v184
    %v197 = vpack.c.bf16 %v187, %v186
    %v198 = vpack.c.bf16 %v189, %v188
    %v199 = vpack.c.bf16 %v191, %v190
    %v216 = vunpack.c.l.b16 %v160
    %v217 = vunpack.c.l.b16 %v161
    %v218 = vunpack.c.l.b16 %v162
    %v219 = vunpack.c.l.b16 %v163
    %v220 = vunpack.c.l.b16 %v164
    %v221 = vunpack.c.l.b16 %v165
    %v222 = vunpack.c.l.b16 %v166
    %v223 = vunpack.c.l.b16 %v167
    %v224 = vunpack.c.l.b16 %v168
    %v225 = vunpack.c.l.b16 %v169
    %v226 = vunpack.c.l.b16 %v170
    %v227 = vunpack.c.l.b16 %v171
    %v228 = vunpack.c.l.b16 %v172
    %v229 = vunpack.c.l.b16 %v173
    %v230 = vunpack.c.l.b16 %v174
    %v231 = vunpack.c.l.b16 %v175
    %v232 = vpack.c.b16 %v217, %v216
    %v233 = vpack.c.b16 %v219, %v218
    %v234 = vpack.c.b16 %v221, %v220
    %v235 = vpack.c.b16 %v223, %v222
    %v236 = vpack.c.b16 %v225, %v224
    %v237 = vpack.c.b16 %v227, %v226
    %v238 = vpack.c.b16 %v229, %v228
    %v239 = vpack.c.b16 %v231, %v230
    %248 = vmatprep.subr.bf16.mxu0 0
    %249 = vmatpush1.bf16.msra.mxu0 %v192
    %250 = vmatprep.subr.bf16.mxu0 0
    %251 = vmatpush1.bf16.msra.mxu0 %v193
    %252 = vmatprep.subr.bf16.mxu0 0
    %253 = vmatpush1.bf16.msra.mxu0 %v194
    %254 = vmatprep.subr.bf16.mxu0 0
    %255 = vmatpush1.bf16.msra.mxu0 %v195
    %256 = vmatprep.subr.bf16.mxu0 0
    %257 = vmatpush1.bf16.msra.mxu0 %v196
    %258 = vmatprep.subr.bf16.mxu0 0
    %259 = vmatpush1.bf16.msra.mxu0 %v197
    %260 = vmatprep.subr.bf16.mxu0 0
    %261 = vmatpush1.bf16.msra.mxu0 %v198
    %262 = vmatprep.subr.bf16.mxu0 0
    %263 = vmatpush1.bf16.msra.mxu0 %v199
    %264 = vmatprep.subr.bf16.mxu0 0
    %265 = vmatpush1.bf16.msra.mxu0 0
    %266 = vmatprep.subr.bf16.mxu0 0
    %267 = vmatpush1.bf16.msra.mxu0 0
    %268 = vmatprep.subr.bf16.mxu0 0
    %269 = vmatpush1.bf16.msra.mxu0 0
    %270 = vmatprep.subr.bf16.mxu0 0
    %271 = vmatpush1.bf16.msra.mxu0 0
    %272 = vmatprep.subr.bf16.mxu0 0
    %273 = vmatpush1.bf16.msra.mxu0 0
    %274 = vmatprep.subr.bf16.mxu0 0
    %275 = vmatpush1.bf16.msra.mxu0 0
    %276 = vmatprep.subr.bf16.mxu0 0
    %277 = vmatpush1.bf16.msra.mxu0 0
    %278 = vmatprep.subr.bf16.mxu0 0
    %279 = vmatpush1.bf16.msra.mxu0 0
    %280 = vmatprep.mubr.bf16.mxu0 0
    %281 = vmatmul.mubr.bf16.gmra.mrb[0].mxu0 %v232
    %v282 = vpop.f32.mrb[0].mxu0
    %v283 = vadd.f32 0.0, %v282
    %v284 = vpop.f32.mrb[0].mxu0
    %v285 = vpop.f32.mrb[0].mxu0
    %v286 = vadd.f32 0.0, %v285
    %v287 = vpop.f32.mrb[0].mxu0
    %288 = vmatprep.mubr.bf16.mxu0 0
    %289 = vmatmul.mubr.bf16.gmra.mrb[0].mxu0 %v233
    %v290 = vpop.f32.mrb[0].mxu0
    %v291 = vadd.f32 0.0, %v290
    %v292 = vpop.f32.mrb[0].mxu0
    %v293 = vpop.f32.mrb[0].mxu0
    %v294 = vadd.f32 0.0, %v293
    %v295 = vpop.f32.mrb[0].mxu0
    %296 = vmatprep.mubr.bf16.mxu0 0
    %297 = vmatmul.mubr.bf16.gmra.mrb[0].mxu0 %v234
    %v298 = vpop.f32.mrb[0].mxu0
    %v299 = vadd.f32 0.0, %v298
    %v300 = vpop.f32.mrb[0].mxu0
    %v301 = vpop.f32.mrb[0].mxu0
    %v302 = vadd.f32 0.0, %v301
    %v303 = vpop.f32.mrb[0].mxu0
    %304 = vmatprep.mubr.bf16.mxu0 0
    %305 = vmatmul.mubr.bf16.gmra.mrb[0].mxu0 %v235
    %v306 = vpop.f32.mrb[0].mxu0
    %v307 = vadd.f32 0.0, %v306
    %v308 = vpop.f32.mrb[0].mxu0
    %v309 = vpop.f32.mrb[0].mxu0
    %v310 = vadd.f32 0.0, %v309
    %v311 = vpop.f32.mrb[0].mxu0
    %312 = vmatprep.mubr.bf16.mxu0 0
    %313 = vmatmul.mubr.bf16.gmra.mrb[0].mxu0 %v236
    %v314 = vpop.f32.mrb[0].mxu0
    %v315 = vadd.f32 0.0, %v314
    %v316 = vpop.f32.mrb[0].mxu0
    %v317 = vpop.f32.mrb[0].mxu0
    %v318 = vadd.f32 0.0, %v317
    %v319 = vpop.f32.mrb[0].mxu0
    %320 = vmatprep.mubr.bf16.mxu0 0
    %321 = vmatmul.mubr.bf16.gmra.mrb[0].mxu0 %v237
    %v322 = vpop.f32.mrb[0].mxu0
    %v323 = vadd.f32 0.0, %v322
    %v324 = vpop.f32.mrb[0].mxu0
    %v325 = vpop.f32.mrb[0].mxu0
    %v326 = vadd.f32 0.0, %v325
    %v327 = vpop.f32.mrb[0].mxu0
    %328 = vmatprep.mubr.bf16.mxu0 0
    %329 = vmatmul.mubr.bf16.gmra.mrb[0].mxu0 %v238
    %v330 = vpop.f32.mrb[0].mxu0
    %v331 = vadd.f32 0.0, %v330
    %v332 = vpop.f32.mrb[0].mxu0
    %v333 = vpop.f32.mrb[0].mxu0
    %v334 = vadd.f32 0.0, %v333
    %v335 = vpop.f32.mrb[0].mxu0
    %336 = vmatprep.mubr.bf16.mxu0 0
    %337 = vmatmul.mubr.bf16.gmra.mrb[0].mxu0 %v239
    %v338 = vpop.f32.mrb[0].mxu0
    %v339 = vadd.f32 0.0, %v338
    %v340 = vpop.f32.mrb[0].mxu0
    %v341 = vpop.f32.mrb[0].mxu0
    %v342 = vadd.f32 0.0, %v341
    %v343 = vpop.f32.mrb[0].mxu0
    %344 = vdwg.mxu0
    %v345 = vadd.f32 %v144, %v283
    %v346 = vadd.f32 %v145, %v286
    %v347 = vadd.f32 %v146, %v291
    %v348 = vadd.f32 %v147, %v294
    %v349 = vadd.f32 %v148, %v299
    %v350 = vadd.f32 %v149, %v302
    %v351 = vadd.f32 %v150, %v307
    %v352 = vadd.f32 %v151, %v310
    %v353 = vadd.f32 %v152, %v315
    %v354 = vadd.f32 %v153, %v318
    %v355 = vadd.f32 %v154, %v323
    %v356 = vadd.f32 %v155, %v326
    %v357 = vadd.f32 %v156, %v331
    %v358 = vadd.f32 %v157, %v334
    %v359 = vadd.f32 %v158, %v339
    %v360 = vadd.f32 %v159, %v342
    %361 = vst [vmem:[#allocation2] sm:$0xff] %v345
    %362 = vst [vmem:[#allocation2 + $0x8] sm:$0xff] %v346
    %363 = vst [vmem:[#allocation2 + $0x10] sm:$0xff] %v347
    %364 = vst [vmem:[#allocation2 + $0x18] sm:$0xff] %v348
    %365 = vst [vmem:[#allocation2 + $0x20] sm:$0xff] %v349
    %366 = vst [vmem:[#allocation2 + $0x28] sm:$0xff] %v350
    %367 = vst [vmem:[#allocation2 + $0x30] sm:$0xff] %v351
    %368 = vst [vmem:[#allocation2 + $0x38] sm:$0xff] %v352
    %369 = vst [vmem:[#allocation2 + $0x40] sm:$0xff] %v353
    %370 = vst [vmem:[#allocation2 + $0x48] sm:$0xff] %v354
    %371 = vst [vmem:[#allocation2 + $0x50] sm:$0xff] %v355
    %372 = vst [vmem:[#allocation2 + $0x58] sm:$0xff] %v356
    %373 = vst [vmem:[#allocation2 + $0x60] sm:$0xff] %v357
    %374 = vst [vmem:[#allocation2 + $0x68] sm:$0xff] %v358
    %375 = vst [vmem:[#allocation2 + $0x70] sm:$0xff] %v359
    %376 = vst [vmem:[#allocation2 + $0x78] sm:$0xff] %v360
    // Predicated region
    $region70: #{tpu_custom_call.1} parent=1 // pred_check
      %p377 = pneg %p108
    $region71: #{tpu_custom_call.1} parent=1 // pred_check_branch
      %379 = sbr.rel (%p377) target = $region73
    $region72: #{tpu_custom_call.1} parent=1 // pred_region
      %v380 = vld [vmem:[#allocation2] sm:$0xff]
      %v381 = vld [vmem:[#allocation2 + $0x8] sm:$0xff]
      %v382 = vld [vmem:[#allocation2 + $0x10] sm:$0xff]
      %v383 = vld [vmem:[#allocation2 + $0x18] sm:$0xff]
      %v384 = vld [vmem:[#allocation2 + $0x20] sm:$0xff]
      %v385 = vld [vmem:[#allocation2 + $0x28] sm:$0xff]
      %v386 = vld [vmem:[#allocation2 + $0x30] sm:$0xff]
      %v387 = vld [vmem:[#allocation2 + $0x38] sm:$0xff]
      %v388 = vld [vmem:[#allocation2 + $0x40] sm:$0xff]
      %v389 = vld [vmem:[#allocation2 + $0x48] sm:$0xff]
      %v390 = vld [vmem:[#allocation2 + $0x50] sm:$0xff]
      %v391 = vld [vmem:[#allocation2 + $0x58] sm:$0xff]
      %v392 = vld [vmem:[#allocation2 + $0x60] sm:$0xff]
      %v393 = vld [vmem:[#allocation2 + $0x68] sm:$0xff]
      %v394 = vld [vmem:[#allocation2 + $0x70] sm:$0xff]
      %v395 = vld [vmem:[#allocation2 + $0x78] sm:$0xff]
      %v396 = vld [vmem:[#allocation9] sm:$0xff]
      %v397 = vld [vmem:[#allocation9 + $0x8] sm:$0xff]
      %v398 = vld [vmem:[#allocation9 + $0x10] sm:$0xff]
      %v399 = vld [vmem:[#allocation9 + $0x18] sm:$0xff]
      %v400 = vld [vmem:[#allocation9 + $0x20] sm:$0xff]
      %v401 = vld [vmem:[#allocation9 + $0x28] sm:$0xff]
      %v402 = vld [vmem:[#allocation9 + $0x30] sm:$0xff]
      %v403 = vld [vmem:[#allocation9 + $0x38] sm:$0xff]
      %v404 = vld [vmem:[#allocation9 + $0x40] sm:$0xff]
      %v405 = vld [vmem:[#allocation9 + $0x48] sm:$0xff]
      %v406 = vld [vmem:[#allocation9 + $0x50] sm:$0xff]
      %v407 = vld [vmem:[#allocation9 + $0x58] sm:$0xff]
      %v408 = vld [vmem:[#allocation9 + $0x60] sm:$0xff]
      %v409 = vld [vmem:[#allocation9 + $0x68] sm:$0xff]
      %v410 = vld [vmem:[#allocation9 + $0x70] sm:$0xff]
      %v411 = vld [vmem:[#allocation9 + $0x78] sm:$0xff]
      %v412 = vld [vmem:[%s4] sm:$0x1]
      %v414 = vlaneseq
      %v415 = vshrl.u32 %v414, 7
      %v416 = vsub.s32 0, %v415
      %v417 = vrot.slane %v412, %v416
      %419 = vmatprep.subr.mxu0 0.0
      %420 = vmatpush1.msra.mxu0 %v396
      %421 = vmatprep.subr.mxu0 0.0
      %422 = vmatpush1.msra.mxu0 %v397
      %423 = vmatprep.subr.mxu0 0.0
      %424 = vmatpush1.msra.mxu0 %v398
      %425 = vmatprep.subr.mxu0 0.0
      %426 = vmatpush1.msra.mxu0 %v399
      %427 = vmatprep.subr.mxu0 0.0
      %428 = vmatpush1.msra.mxu0 %v400
      %429 = vmatprep.subr.mxu0 0.0
      %430 = vmatpush1.msra.mxu0 %v401
      %431 = vmatprep.subr.mxu0 0.0
      %432 = vmatpush1.msra.mxu0 %v402
      %433 = vmatprep.subr.mxu0 0.0
      %434 = vmatpush1.msra.mxu0 %v403
      %435 = vmatprep.subr.mxu0 0.0
      %436 = vmatpush1.msra.mxu0 %v404
      %437 = vmatprep.subr.mxu0 0.0
      %438 = vmatpush1.msra.mxu0 %v405
      %439 = vmatprep.subr.mxu0 0.0
      %440 = vmatpush1.msra.mxu0 %v406
      %441 = vmatprep.subr.mxu0 0.0
      %442 = vmatpush1.msra.mxu0 %v407
      %443 = vmatprep.subr.mxu0 0.0
      %444 = vmatpush1.msra.mxu0 %v408
      %445 = vmatprep.subr.mxu0 0.0
      %446 = vmatpush1.msra.mxu0 %v409
      %447 = vmatprep.subr.mxu0 0.0
      %448 = vmatpush1.msra.mxu0 %v410
      %449 = vmatprep.subr.mxu0 0.0
      %450 = vmatpush1.msra.mxu0 %v411
      %451 = vmatprep.subr.mxu0 0.0
      %452 = vmatpush1.msra.mxu0 0.0
      %453 = vmatprep.subr.mxu0 0.0
      %454 = vmatpush1.msra.mxu0 0.0
      %455 = vmatprep.subr.mxu0 0.0
      %456 = vmatpush1.msra.mxu0 0.0
      %457 = vmatprep.subr.mxu0 0.0
      %458 = vmatpush1.msra.mxu0 0.0
      %459 = vmatprep.subr.mxu0 0.0
      %460 = vmatpush1.msra.mxu0 0.0
      %461 = vmatprep.subr.mxu0 0.0
      %462 = vmatpush1.msra.mxu0 0.0
      %463 = vmatprep.subr.mxu0 0.0
      %464 = vmatpush1.msra.mxu0 0.0
      %465 = vmatprep.subr.mxu0 0.0
      %466 = vmatpush1.msra.mxu0 0.0
      %467 = vmatprep.subr.mxu0 0.0
      %468 = vmatpush1.msra.mxu0 0.0
      %469 = vmatprep.subr.mxu0 0.0
      %470 = vmatpush1.msra.mxu0 0.0
      %471 = vmatprep.subr.mxu0 0.0
      %472 = vmatpush1.msra.mxu0 0.0
      %473 = vmatprep.subr.mxu0 0.0
      %474 = vmatpush1.msra.mxu0 0.0
      %475 = vmatprep.subr.mxu0 0.0
      %476 = vmatpush1.msra.mxu0 0.0
      %477 = vmatprep.subr.mxu0 0.0
      %478 = vmatpush1.msra.mxu0 0.0
      %479 = vmatprep.subr.mxu0 0.0
      %480 = vmatpush1.msra.mxu0 0.0
      %481 = vmatprep.subr.mxu0 0.0
      %482 = vmatpush1.msra.mxu0 0.0
      %483 = vmatprep.mubr.f32.mxu0 0.0
      %484 = vmatmul.mubr.f32.gmra.mrb[0].mxu0 %v380
      %v485 = vpop.f32.mrb[0].mxu0
      %v486 = vadd.f32 %v417, %v485
      %v487 = vpop.f32.mrb[0].mxu0
      %488 = vmatprep.mubr.f32.mxu0 0.0
      %489 = vmatmul.mubr.f32.gmra.mrb[0].mxu0 %v381
      %v490 = vpop.f32.mrb[0].mxu0
      %v491 = vadd.f32 %v417, %v490
      %v492 = vpop.f32.mrb[0].mxu0
      %493 = vmatprep.mubr.f32.mxu0 0.0
      %494 = vmatmul.mubr.f32.gmra.mrb[0].mxu0 %v382
      %v495 = vpop.f32.mrb[0].mxu0
      %v496 = vadd.f32 %v417, %v495
      %v497 = vpop.f32.mrb[0].mxu0
      %498 = vmatprep.mubr.f32.mxu0 0.0
      %499 = vmatmul.mubr.f32.gmra.mrb[0].mxu0 %v383
      %v500 = vpop.f32.mrb[0].mxu0
      %v501 = vadd.f32 %v417, %v500
      %v502 = vpop.f32.mrb[0].mxu0
      %503 = vmatprep.mubr.f32.mxu0 0.0
      %504 = vmatmul.mubr.f32.gmra.mrb[0].mxu0 %v384
      %v505 = vpop.f32.mrb[0].mxu0
      %v506 = vadd.f32 %v417, %v505
      %v507 = vpop.f32.mrb[0].mxu0
      %508 = vmatprep.mubr.f32.mxu0 0.0
      %509 = vmatmul.mubr.f32.gmra.mrb[0].mxu0 %v385
      %v510 = vpop.f32.mrb[0].mxu0
      %v511 = vadd.f32 %v417, %v510
      %v512 = vpop.f32.mrb[0].mxu0
      %513 = vmatprep.mubr.f32.mxu0 0.0
      %514 = vmatmul.mubr.f32.gmra.mrb[0].mxu0 %v386
      %v515 = vpop.f32.mrb[0].mxu0
      %v516 = vadd.f32 %v417, %v515
      %v517 = vpop.f32.mrb[0].mxu0
      %518 = vmatprep.mubr.f32.mxu0 0.0
      %519 = vmatmul.mubr.f32.gmra.mrb[0].mxu0 %v387
      %v520 = vpop.f32.mrb[0].mxu0
      %v521 = vadd.f32 %v417, %v520
      %v522 = vpop.f32.mrb[0].mxu0
      %523 = vmatprep.mubr.f32.mxu0 0.0
      %524 = vmatmul.mubr.f32.gmra.mrb[0].mxu0 %v388
      %v525 = vpop.f32.mrb[0].mxu0
      %v526 = vadd.f32 %v417, %v525
      %v527 = vpop.f32.mrb[0].mxu0
      %528 = vmatprep.mubr.f32.mxu0 0.0
      %529 = vmatmul.mubr.f32.gmra.mrb[0].mxu0 %v389
      %v530 = vpop.f32.mrb[0].mxu0
      %v531 = vadd.f32 %v417, %v530
      %v532 = vpop.f32.mrb[0].mxu0
      %533 = vmatprep.mubr.f32.mxu0 0.0
      %534 = vmatmul.mubr.f32.gmra.mrb[0].mxu0 %v390
      %v535 = vpop.f32.mrb[0].mxu0
      %v536 = vadd.f32 %v417, %v535
      %v537 = vpop.f32.mrb[0].mxu0
      %538 = vmatprep.mubr.f32.mxu0 0.0
      %539 = vmatmul.mubr.f32.gmra.mrb[0].mxu0 %v391
      %v540 = vpop.f32.mrb[0].mxu0
      %v541 = vadd.f32 %v417, %v540
      %v542 = vpop.f32.mrb[0].mxu0
      %543 = vmatprep.mubr.f32.mxu0 0.0
      %544 = vmatmul.mubr.f32.gmra.mrb[0].mxu0 %v392
      %v545 = vpop.f32.mrb[0].mxu0
      %v546 = vadd.f32 %v417, %v545
      %v547 = vpop.f32.mrb[0].mxu0
      %548 = vmatprep.mubr.f32.mxu0 0.0
      %549 = vmatmul.mubr.f32.gmra.mrb[0].mxu0 %v393
      %v550 = vpop.f32.mrb[0].mxu0
      %v551 = vadd.f32 %v417, %v550
      %v552 = vpop.f32.mrb[0].mxu0
      %553 = vmatprep.mubr.f32.mxu0 0.0
      %554 = vmatmul.mubr.f32.gmra.mrb[0].mxu0 %v394
      %v555 = vpop.f32.mrb[0].mxu0
      %v556 = vadd.f32 %v417, %v555
      %v557 = vpop.f32.mrb[0].mxu0
      %558 = vmatprep.mubr.f32.mxu0 0.0
      %559 = vmatmul.mubr.f32.gmra.mrb[0].mxu0 %v395
      %v560 = vpop.f32.mrb[0].mxu0
      %v561 = vadd.f32 %v417, %v560
      %v562 = vpop.f32.mrb[0].mxu0
      %563 = vdwg.mxu0
      %v564 = vmax.f32 %v486, 0.0
      %v565 = vmax.f32 %v491, 0.0
      %v566 = vmax.f32 %v496, 0.0
      %v567 = vmax.f32 %v501, 0.0
      %v568 = vmax.f32 %v506, 0.0
      %v569 = vmax.f32 %v511, 0.0
      %v570 = vmax.f32 %v516, 0.0
      %v571 = vmax.f32 %v521, 0.0
      %v572 = vmax.f32 %v526, 0.0
      %v573 = vmax.f32 %v531, 0.0
      %v574 = vmax.f32 %v536, 0.0
      %v575 = vmax.f32 %v541, 0.0
      %v576 = vmax.f32 %v546, 0.0
      %v577 = vmax.f32 %v551, 0.0
      %v578 = vmax.f32 %v556, 0.0
      %v579 = vmax.f32 %v561, 0.0
      %v580 = vld [vmem:[#allocation11] sm:$0xff]
      %v581 = vld [vmem:[#allocation11 + $0x8] sm:$0xff]
      %v582 = vld [vmem:[#allocation11 + $0x10] sm:$0xff]
      %v583 = vld [vmem:[#allocation11 + $0x18] sm:$0xff]
      %v584 = vld [vmem:[#allocation11 + $0x20] sm:$0xff]
      %v585 = vld [vmem:[#allocation11 + $0x28] sm:$0xff]
      %v586 = vld [vmem:[#allocation11 + $0x30] sm:$0xff]
      %v587 = vld [vmem:[#allocation11 + $0x38] sm:$0xff]
      %v588 = vld [vmem:[#allocation11 + $0x40] sm:$0xff]
      %v589 = vld [vmem:[#allocation11 + $0x48] sm:$0xff]
      %v590 = vld [vmem:[#allocation11 + $0x50] sm:$0xff]
      %v591 = vld [vmem:[#allocation11 + $0x58] sm:$0xff]
      %v592 = vld [vmem:[#allocation11 + $0x60] sm:$0xff]
      %v593 = vld [vmem:[#allocation11 + $0x68] sm:$0xff]
      %v594 = vld [vmem:[#allocation11 + $0x70] sm:$0xff]
      %v595 = vld [vmem:[#allocation11 + $0x78] sm:$0xff]
      %v596 = vld [vmem:[%s6] sm:$0x1]
      %v598 = vlaneseq
      %v599 = vshrl.u32 %v598, 7
      %v600 = vsub.s32 0, %v599
      %v601 = vrot.slane %v596, %v600
      %603 = vmatprep.subr.mxu0 0.0
      %604 = vmatpush1.msra.mxu0 %v580
      %605 = vmatprep.subr.mxu0 0.0
      %606 = vmatpush1.msra.mxu0 %v581
      %607 = vmatprep.subr.mxu0 0.0
      %608 = vmatpush1.msra.mxu0 %v582
      %609 = vmatprep.subr.mxu0 0.0
      %610 = vmatpush1.msra.mxu0 %v583
      %611 = vmatprep.subr.mxu0 0.0
      %612 = vmatpush1.msra.mxu0 %v584
      %613 = vmatprep.subr.mxu0 0.0
      %614 = vmatpush1.msra.mxu0 %v585
      %615 = vmatprep.subr.mxu0 0.0
      %616 = vmatpush1.msra.mxu0 %v586
      %617 = vmatprep.subr.mxu0 0.0
      %618 = vmatpush1.msra.mxu0 %v587
      %619 = vmatprep.subr.mxu0 0.0
      %620 = vmatpush1.msra.mxu0 %v588
      %621 = vmatprep.subr.mxu0 0.0
      %622 = vmatpush1.msra.mxu0 %v589
      %623 = vmatprep.subr.mxu0 0.0
      %624 = vmatpush1.msra.mxu0 %v590
      %625 = vmatprep.subr.mxu0 0.0
      %626 = vmatpush1.msra.mxu0 %v591
      %627 = vmatprep.subr.mxu0 0.0
      %628 = vmatpush1.msra.mxu0 %v592
      %629 = vmatprep.subr.mxu0 0.0
      %630 = vmatpush1.msra.mxu0 %v593
      %631 = vmatprep.subr.mxu0 0.0
      %632 = vmatpush1.msra.mxu0 %v594
      %633 = vmatprep.subr.mxu0 0.0
      %634 = vmatpush1.msra.mxu0 %v595
      %635 = vmatprep.subr.mxu0 0.0
      %636 = vmatpush1.msra.mxu0 0.0
      %637 = vmatprep.subr.mxu0 0.0
      %638 = vmatpush1.msra.mxu0 0.0
      %639 = vmatprep.subr.mxu0 0.0
      %640 = vmatpush1.msra.mxu0 0.0
      %641 = vmatprep.subr.mxu0 0.0
      %642 = vmatpush1.msra.mxu0 0.0
      %643 = vmatprep.subr.mxu0 0.0
      %644 = vmatpush1.msra.mxu0 0.0
      %645 = vmatprep.subr.mxu0 0.0
      %646 = vmatpush1.msra.mxu0 0.0
      %647 = vmatprep.subr.mxu0 0.0
      %648 = vmatpush1.msra.mxu0 0.0
      %649 = vmatprep.subr.mxu0 0.0
      %650 = vmatpush1.msra.mxu0 0.0
      %651 = vmatprep.subr.mxu0 0.0
      %652 = vmatpush1.msra.mxu0 0.0
      %653 = vmatprep.subr.mxu0 0.0
      %654 = vmatpush1.msra.mxu0 0.0
      %655 = vmatprep.subr.mxu0 0.0
      %656 = vmatpush1.msra.mxu0 0.0
      %657 = vmatprep.subr.mxu0 0.0
      %658 = vmatpush1.msra.mxu0 0.0
      %659 = vmatprep.subr.mxu0 0.0
      %660 = vmatpush1.msra.mxu0 0.0
      %661 = vmatprep.subr.mxu0 0.0
      %662 = vmatpush1.msra.mxu0 0.0
      %663 = vmatprep.subr.mxu0 0.0
      %664 = vmatpush1.msra.mxu0 0.0
      %665 = vmatprep.subr.mxu0 0.0
      %666 = vmatpush1.msra.mxu0 0.0
      %667 = vmatprep.mubr.f32.mxu0 0.0
      %668 = vmatmul.mubr.f32.gmra.mrb[0].mxu0 %v564
      %v669 = vpop.f32.mrb[0].mxu0
      %v670 = vadd.f32 %v601, %v669
      %v671 = vpop.f32.mrb[0].mxu0
      %672 = vmatprep.mubr.f32.mxu0 0.0
      %673 = vmatmul.mubr.f32.gmra.mrb[0].mxu0 %v565
      %v674 = vpop.f32.mrb[0].mxu0
      %v675 = vadd.f32 %v601, %v674
      %v676 = vpop.f32.mrb[0].mxu0
      %677 = vmatprep.mubr.f32.mxu0 0.0
      %678 = vmatmul.mubr.f32.gmra.mrb[0].mxu0 %v566
      %v679 = vpop.f32.mrb[0].mxu0
      %v680 = vadd.f32 %v601, %v679
      %v681 = vpop.f32.mrb[0].mxu0
      %682 = vmatprep.mubr.f32.mxu0 0.0
      %683 = vmatmul.mubr.f32.gmra.mrb[0].mxu0 %v567
      %v684 = vpop.f32.mrb[0].mxu0
      %v685 = vadd.f32 %v601, %v684
      %v686 = vpop.f32.mrb[0].mxu0
      %687 = vmatprep.mubr.f32.mxu0 0.0
      %688 = vmatmul.mubr.f32.gmra.mrb[0].mxu0 %v568
      %v689 = vpop.f32.mrb[0].mxu0
      %v690 = vadd.f32 %v601, %v689
      %v691 = vpop.f32.mrb[0].mxu0
      %692 = vmatprep.mubr.f32.mxu0 0.0
      %693 = vmatmul.mubr.f32.gmra.mrb[0].mxu0 %v569
      %v694 = vpop.f32.mrb[0].mxu0
      %v695 = vadd.f32 %v601, %v694
      %v696 = vpop.f32.mrb[0].mxu0
      %697 = vmatprep.mubr.f32.mxu0 0.0
      %698 = vmatmul.mubr.f32.gmra.mrb[0].mxu0 %v570
      %v699 = vpop.f32.mrb[0].mxu0
      %v700 = vadd.f32 %v601, %v699
      %v701 = vpop.f32.mrb[0].mxu0
      %702 = vmatprep.mubr.f32.mxu0 0.0
      %703 = vmatmul.mubr.f32.gmra.mrb[0].mxu0 %v571
      %v704 = vpop.f32.mrb[0].mxu0
      %v705 = vadd.f32 %v601, %v704
      %v706 = vpop.f32.mrb[0].mxu0
      %707 = vmatprep.mubr.f32.mxu0 0.0
      %708 = vmatmul.mubr.f32.gmra.mrb[0].mxu0 %v572
      %v709 = vpop.f32.mrb[0].mxu0
      %v710 = vadd.f32 %v601, %v709
      %v711 = vpop.f32.mrb[0].mxu0
      %712 = vmatprep.mubr.f32.mxu0 0.0
      %713 = vmatmul.mubr.f32.gmra.mrb[0].mxu0 %v573
      %v714 = vpop.f32.mrb[0].mxu0
      %v715 = vadd.f32 %v601, %v714
      %v716 = vpop.f32.mrb[0].mxu0
      %717 = vmatprep.mubr.f32.mxu0 0.0
      %718 = vmatmul.mubr.f32.gmra.mrb[0].mxu0 %v574
      %v719 = vpop.f32.mrb[0].mxu0
      %v720 = vadd.f32 %v601, %v719
      %v721 = vpop.f32.mrb[0].mxu0
      %722 = vmatprep.mubr.f32.mxu0 0.0
      %723 = vmatmul.mubr.f32.gmra.mrb[0].mxu0 %v575
      %v724 = vpop.f32.mrb[0].mxu0
      %v725 = vadd.f32 %v601, %v724
      %v726 = vpop.f32.mrb[0].mxu0
      %727 = vmatprep.mubr.f32.mxu0 0.0
      %728 = vmatmul.mubr.f32.gmra.mrb[0].mxu0 %v576
      %v729 = vpop.f32.mrb[0].mxu0
      %v730 = vadd.f32 %v601, %v729
      %v731 = vpop.f32.mrb[0].mxu0
      %732 = vmatprep.mubr.f32.mxu0 0.0
      %733 = vmatmul.mubr.f32.gmra.mrb[0].mxu0 %v577
      %v734 = vpop.f32.mrb[0].mxu0
      %v735 = vadd.f32 %v601, %v734
      %v736 = vpop.f32.mrb[0].mxu0
      %737 = vmatprep.mubr.f32.mxu0 0.0
      %738 = vmatmul.mubr.f32.gmra.mrb[0].mxu0 %v578
      %v739 = vpop.f32.mrb[0].mxu0
      %v740 = vadd.f32 %v601, %v739
      %v741 = vpop.f32.mrb[0].mxu0
      %742 = vmatprep.mubr.f32.mxu0 0.0
      %743 = vmatmul.mubr.f32.gmra.mrb[0].mxu0 %v579
      %v744 = vpop.f32.mrb[0].mxu0
      %v745 = vadd.f32 %v601, %v744
      %v746 = vpop.f32.mrb[0].mxu0
      %747 = vdwg.mxu0
      %v748 = vmax.f32 %v670, 0.0
      %v749 = vmax.f32 %v675, 0.0
      %v750 = vmax.f32 %v680, 0.0
      %v751 = vmax.f32 %v685, 0.0
      %v752 = vmax.f32 %v690, 0.0
      %v753 = vmax.f32 %v695, 0.0
      %v754 = vmax.f32 %v700, 0.0
      %v755 = vmax.f32 %v705, 0.0
      %v756 = vmax.f32 %v710, 0.0
      %v757 = vmax.f32 %v715, 0.0
      %v758 = vmax.f32 %v720, 0.0
      %v759 = vmax.f32 %v725, 0.0
      %v760 = vmax.f32 %v730, 0.0
      %v761 = vmax.f32 %v735, 0.0
      %v762 = vmax.f32 %v740, 0.0
      %v763 = vmax.f32 %v745, 0.0
      %v764 = vld [vmem:[%s10] sm:$0x1]
      %v765 = vadd.f32 %v764, 1e-05
      %v766 = vrsqrt.pop %v765
      %v767 = vld [vmem:[%s9] sm:$0x1]
      %v769 = vlaneseq
      %v770 = vshrl.u32 %v769, 7
      %v771 = vsub.s32 0, %v770
      %v772 = vrot.slane %v767, %v771
      %v774 = vsub.f32 %v748, %v772
      %v775 = vsub.f32 %v749, %v772
      %v776 = vsub.f32 %v750, %v772
      %v777 = vsub.f32 %v751, %v772
      %v778 = vsub.f32 %v752, %v772
      %v779 = vsub.f32 %v753, %v772
      %v780 = vsub.f32 %v754, %v772
      %v781 = vsub.f32 %v755, %v772
      %v782 = vsub.f32 %v756, %v772
      %v783 = vsub.f32 %v757, %v772
      %v784 = vsub.f32 %v758, %v772
      %v785 = vsub.f32 %v759, %v772
      %v786 = vsub.f32 %v760, %v772
      %v787 = vsub.f32 %v761, %v772
      %v788 = vsub.f32 %v762, %v772
      %v789 = vsub.f32 %v763, %v772
      %v791 = vlaneseq
      %v792 = vshrl.u32 %v791, 7
      %v793 = vsub.s32 0, %v792
      %v794 = vrot.slane %v766, %v793
      %v796 = vmul.f32 %v774, %v794
      %v797 = vmul.f32 %v775, %v794
      %v798 = vmul.f32 %v776, %v794
      %v799 = vmul.f32 %v777, %v794
      %v800 = vmul.f32 %v778, %v794
      %v801 = vmul.f32 %v779, %v794
      %v802 = vmul.f32 %v780, %v794
      %v803 = vmul.f32 %v781, %v794
      %v804 = vmul.f32 %v782, %v794
      %v805 = vmul.f32 %v783, %v794
      %v806 = vmul.f32 %v784, %v794
      %v807 = vmul.f32 %v785, %v794
      %v808 = vmul.f32 %v786, %v794
      %v809 = vmul.f32 %v787, %v794
      %v810 = vmul.f32 %v788, %v794
      %v811 = vmul.f32 %v789, %v794
      %v812 = vld [vmem:[%s7] sm:$0x1]
      %v814 = vlaneseq
      %v815 = vshrl.u32 %v814, 7
      %v816 = vsub.s32 0, %v815
      %v817 = vrot.slane %v812, %v816
      %v819 = vmul.f32 %v796, %v817
      %v820 = vmul.f32 %v797, %v817
      %v821 = vmul.f32 %v798, %v817
      %v822 = vmul.f32 %v799, %v817
      %v823 = vmul.f32 %v800, %v817
      %v824 = vmul.f32 %v801, %v817
      %v825 = vmul.f32 %v802, %v817
      %v826 = vmul.f32 %v803, %v817
      %v827 = vmul.f32 %v804, %v817
      %v828 = vmul.f32 %v805, %v817
      %v829 = vmul.f32 %v806, %v817
      %v830 = vmul.f32 %v807, %v817
      %v831 = vmul.f32 %v808, %v817
      %v832 = vmul.f32 %v809, %v817
      %v833 = vmul.f32 %v810, %v817
      %v834 = vmul.f32 %v811, %v817
      %v835 = vld [vmem:[%s8] sm:$0x1]
      %v837 = vlaneseq
      %v838 = vshrl.u32 %v837, 7
      %v839 = vsub.s32 0, %v838
      %v840 = vrot.slane %v835, %v839
      %v842 = vadd.f32 %v819, %v840
      %v843 = vadd.f32 %v820, %v840
      %v844 = vadd.f32 %v821, %v840
      %v845 = vadd.f32 %v822, %v840
      %v846 = vadd.f32 %v823, %v840
      %v847 = vadd.f32 %v824, %v840
      %v848 = vadd.f32 %v825, %v840
      %v849 = vadd.f32 %v826, %v840
      %v850 = vadd.f32 %v827, %v840
      %v851 = vadd.f32 %v828, %v840
      %v852 = vadd.f32 %v829, %v840
      %v853 = vadd.f32 %v830, %v840
      %v854 = vadd.f32 %v831, %v840
      %v855 = vadd.f32 %v832, %v840
      %v856 = vadd.f32 %v833, %v840
      %v857 = vadd.f32 %v834, %v840
      %858 = vst [vmem:[#allocation12] sm:$0xff] %v842
      %859 = vst [vmem:[#allocation12 + $0x8] sm:$0xff] %v843
      %860 = vst [vmem:[#allocation12 + $0x10] sm:$0xff] %v844
      %861 = vst [vmem:[#allocation12 + $0x18] sm:$0xff] %v845
      %862 = vst [vmem:[#allocation12 + $0x20] sm:$0xff] %v846
      %863 = vst [vmem:[#allocation12 + $0x28] sm:$0xff] %v847
      %864 = vst [vmem:[#allocation12 + $0x30] sm:$0xff] %v848
      %865 = vst [vmem:[#allocation12 + $0x38] sm:$0xff] %v849
      %866 = vst [vmem:[#allocation12 + $0x40] sm:$0xff] %v850
      %867 = vst [vmem:[#allocation12 + $0x48] sm:$0xff] %v851
      %868 = vst [vmem:[#allocation12 + $0x50] sm:$0xff] %v852
      %869 = vst [vmem:[#allocation12 + $0x58] sm:$0xff] %v853
      %870 = vst [vmem:[#allocation12 + $0x60] sm:$0xff] %v854
      %871 = vst [vmem:[#allocation12 + $0x68] sm:$0xff] %v855
      %872 = vst [vmem:[#allocation12 + $0x70] sm:$0xff] %v856
      %873 = vst [vmem:[#allocation12 + $0x78] sm:$0xff] %v857
    $region73: #{tpu_custom_call.1} parent=1 // pred_fallthru
      _
    // Predicated region
    $region74: #{tpu_custom_call.1} parent=1 // pred_check
      _
    $region75: #{tpu_custom_call.1} parent=1 // pred_check_branch
      %875 = sbr.rel (0) target = $region77
    $region76: #{tpu_custom_call.1} parent=1 // pred_region
      %s877 = ssub.s32 2048, 2048
      %878 = vsyncadd [#allocation5], %s877
      %s879 = sshll.u32 [#allocation12], 4
      %s880 = int_to_ptr.vmem [resolvable:$true] %s879
      %885 = dma.vmem_to_hbm [thread:$0]  %s880, 2048, %s11, [#allocation5], 128, 128, 8
    $region77: #{tpu_custom_call.1} parent=1 // pred_fallthru
      _
    // Predicated region
    $region78: #{tpu_custom_call.1} parent=1 // pred_check
      _
    $region79: #{tpu_custom_call.1} parent=1 // pred_check_branch
      %887 = sbr.rel (0) target = $region81
    $region80: #{tpu_custom_call.1} parent=1 // pred_region
      %888 = dma.done [#allocation5], 2048
    $region81: #{tpu_custom_call.1} parent=1 // pred_fallthru
      _
    %889 = vsyncpa [#allocation4], 1
    %890 = vsyncpa [#allocation7], 1
    %891 = vsyncpa [#allocation10], 1
    %892 = vsyncpa [#allocation5], 1

</llo_original>
